<compile_context>
chip_gen: v7x
topology: tpu7x:2x2x1
jax: 0.10.0
libtpu: 0.0.40
codegen_flags: <defaults>
</compile_context>

<pallas_src>
import jax
import jax.numpy as jnp
from jax.experimental import pallas as pl
from jax.experimental.pallas import tpu as pltpu

KH = KW = 5     # conv kernel size
POOL = 2        # max-pool window / stride
CO_PAD = 128    # lane-dense padded output-channel count


def _c2_kernel(p_ref, w_ref, b_ref, o_ref):
    # p_ref: (TN, 4*P_pad, F) bf16 -- im2col patches, quadrant-major per image
    # w_ref: (F, CO_PAD)      bf16 -- conv weights as a matmul matrix (zero-padded cols)
    # b_ref: (1, CO_PAD)      f32  -- bias (zero-padded)
    # o_ref: (TN, P_pad, CO_PAD) f32 -- pooled + ReLU'd output
    TN, QP, F = p_ref.shape
    P_pad = QP // 4
    CO = w_ref.shape[1]

    # One fused MXU matmul over all images and all 4 pool quadrants in this block.
    lhs = p_ref[...].reshape(TN * QP, F)
    y = jnp.dot(lhs, w_ref[...], preferred_element_type=jnp.float32)   # (TN*QP, CO)

    # 2x2 max-pool == max over the 4 quadrant groups (sublane-aligned VPU maxima).
    y = y.reshape(TN, 4, P_pad, CO)
    m = jnp.maximum(jnp.maximum(y[:, 0], y[:, 1]),
                    jnp.maximum(y[:, 2], y[:, 3]))                      # (TN, P_pad, CO)

    # Bias hoisted out of the quadrant max, then ReLU (relu(max(x_q)+b) == max(relu(x_q+b))).
    o_ref[...] = jnp.maximum(m + b_ref[...], 0.0)


def _pick_tn(n):
    """Images per grid step: big enough M for the MXU, but keep >=2 grid blocks (v7x)."""
    tn = min(32, n)
    if n >= 2:
        tn = min(tn, pl.cdiv(n, 2))
    return max(tn, 1)


def c2_forward(img_nchw, weight, bias):
    """img_nchw: (N, 6, H, W); weight: (16, 6, 5, 5); bias: (16,) -> (N, 16, PH, PW)."""
    N, Cin, H, W = img_nchw.shape
    Cout = weight.shape[0]
    OH, OW = H - KH + 1, W - KW + 1          # valid conv (no padding, stride 1)
    PH, PW = OH // POOL, OW // POOL          # MaxPool2d floors
    P = PH * PW
    P_pad = ((P + 7) // 8) * 8               # 25 -> 32: 8-sublane aligned quadrants
    QP = 4 * P_pad
    F = KH * KW * Cin

    TN = _pick_tn(N)
    n_blocks = pl.cdiv(N, TN)
    N_pad = n_blocks * TN

    # ---- glue (plain JAX): quadrant-major im2col in bf16, built straight from
    # strided slices of the raw NHWC image, plus padding to block-aligned shapes.
    x = jnp.transpose(img_nchw, (0, 2, 3, 1)).astype(jnp.bfloat16)     # (N, H, W, Cin) bf16

    quads = []
    for a in range(POOL):
        for b in range(POOL):
            taps = []
            for di in range(KH):
                for dj in range(KW):
                    taps.append(x[:, a + di: a + di + POOL * PH: POOL,
                                     b + dj: b + dj + POOL * PW: POOL, :])
            q = jnp.concatenate(taps, axis=-1)                         # (N, PH, PW, F), (di,dj,c)
            quads.append(q.reshape(N, P, F))
    p = jnp.stack(quads, axis=1)                                       # (N, 4, P, F)
    p = jnp.pad(p, ((0, N_pad - N), (0, 0), (0, P_pad - P), (0, 0)))
    p = p.reshape(N_pad, QP, F)                                        # (N_pad, 4*P_pad, F)

    # weight (Cout, Cin, KH, KW) -> (KH, KW, Cin, Cout) -> (F, Cout), matching patch order;
    # zero-pad channels to CO_PAD for lane-dense matmul output / unmasked stores.
    w_mat = jnp.transpose(weight, (2, 3, 1, 0)).reshape(F, Cout)
    w_mat = jnp.pad(w_mat, ((0, 0), (0, CO_PAD - Cout))).astype(jnp.bfloat16)
    b_mat = jnp.pad(bias.reshape(1, Cout), ((0, 0), (0, CO_PAD - Cout))).astype(jnp.float32)

    # ---- hot path in Pallas ----
    out = pl.pallas_call(
        _c2_kernel,
        out_shape=jax.ShapeDtypeStruct((N_pad, P_pad, CO_PAD), jnp.float32),
        grid_spec=pltpu.PrefetchScalarGridSpec(
            num_scalar_prefetch=0,
            grid=(n_blocks,),
            in_specs=[
                pl.BlockSpec((TN, QP, F), lambda n: (n, 0, 0)),
                pl.BlockSpec((F, CO_PAD), lambda n: (0, 0)),
                pl.BlockSpec((1, CO_PAD), lambda n: (0, 0)),
            ],
            out_specs=pl.BlockSpec((TN, P_pad, CO_PAD), lambda n: (n, 0, 0)),
        ),
        compiler_params=pltpu.CompilerParams(dimension_semantics=("parallel",)),
    )(p, w_mat, b_mat)

    out = out[:N, :P, :Cout].reshape(N, PH, PW, Cout)
    return jnp.transpose(out, (0, 3, 1, 2))                            # back to NCHW


def _c2_reference(img, weight, bias):
    y = jax.lax.conv_general_dilated(img, weight, (1, 1), "VALID",
                                     dimension_numbers=("NCHW", "OIHW", "NCHW"))
    y = jnp.maximum(y + bias[None, :, None, None], 0.0)
    return jax.lax.reduce_window(y, -jnp.inf, jax.lax.max,
                                 (1, 1, POOL, POOL), (1, 1, POOL, POOL), "VALID")


if __name__ == "__main__":
    key = jax.random.PRNGKey(0)
    k_img, k_w, k_b = jax.random.split(key, 3)

    # LeNet-style C2 input: (N=2, C=6, H=14, W=14) -> conv (2,16,10,10) -> pool (2,16,5,5)
    img = jax.random.normal(k_img, (2, 6, 14, 14), dtype=jnp.float32)

    # Deterministic params mimicking nn.Conv2d default init: U(-1/sqrt(fan_in), 1/sqrt(fan_in))
    fan_in = 6 * KH * KW
    bound = 1.0 / (fan_in ** 0.5)
    weight = jax.random.uniform(k_w, (16, 6, KH, KW), jnp.float32, -bound, bound)
    bias = jax.random.uniform(k_b, (16,), jnp.float32, -bound, bound)

    out = c2_forward(img, weight, bias)
    jax.block_until_ready(out)
    assert out.shape == (2, 16, 5, 5), out.shape

    ref = _c2_reference(img, weight, bias)
    assert jnp.allclose(out, ref, atol=8e-2, rtol=0.0), float(jnp.max(jnp.abs(out - ref)))

    print("KERNEL_OK")
</pallas_src>

<mosaic_0001>
module attributes {stable_mosaic.version = 11 : i64} {
  func.func @_c2_kernel(%arg0: i32, %arg1: memref<1x128x150xbf16, #tpu.memory_space<vmem>>, %arg2: memref<150x128xbf16, #tpu.memory_space<vmem>>, %arg3: memref<1x128xf32, #tpu.memory_space<vmem>>, %arg4: memref<1x32x128xf32, #tpu.memory_space<vmem>>) attributes {dimension_semantics = [#tpu.dimension_semantics<parallel>], iteration_bounds = array<i64: 2>, scalar_prefetch = 0 : i64, scratch_operands = 0 : i64, tpu.core_type = #tpu.core_type<tc>, window_params = [{transform_indices = @transform_0, window_bounds = array<i64: 1, 128, 150>}, {pipeline_mode = #tpu.pipeline_mode<synchronous>, transform_indices = @transform_1, window_bounds = array<i64: 150, 128>}, {pipeline_mode = #tpu.pipeline_mode<synchronous>, transform_indices = @transform_2, window_bounds = array<i64: 1, 128>}, {transform_indices = @transform_3, window_bounds = array<i64: 1, 32, 128>}]} {
    %c0 = arith.constant 0 : index
    %c0_0 = arith.constant 0 : index
    %c0_1 = arith.constant 0 : index
    %0 = vector.load %arg1[%c0, %c0_0, %c0_1] : memref<1x128x150xbf16, #tpu.memory_space<vmem>>, vector<1x128x150xbf16>
    %1 = vector.shape_cast %0 : vector<1x128x150xbf16> to vector<128x150xbf16>
    %c0_2 = arith.constant 0 : index
    %c0_3 = arith.constant 0 : index
    %2 = vector.load %arg2[%c0_2, %c0_3] : memref<150x128xbf16, #tpu.memory_space<vmem>>, vector<150x128xbf16>
    %cst = arith.constant dense<0.000000e+00> : vector<128x128xf32>
    %3 = tpu.matmul %1, %2, %cst {dimension_numbers = #tpu.dot_dimension_numbers<[1], [0], [0], [1], [0, 0, 1, 1], [], []>} : vector<128x150xbf16>, vector<150x128xbf16>, vector<128x128xf32> -> vector<128x128xf32>
    %4 = vector.shape_cast %3 : vector<128x128xf32> to vector<1x4x32x128xf32>
    %5 = vector.extract_strided_slice %4 {offsets = [0, 0, 0, 0], sizes = [1, 1, 32, 128], strides = [1, 1, 1, 1]} : vector<1x4x32x128xf32> to vector<1x1x32x128xf32>
    %6 = vector.shape_cast %5 : vector<1x1x32x128xf32> to vector<1x32x128xf32>
    %7 = vector.extract_strided_slice %4 {offsets = [0, 1, 0, 0], sizes = [1, 1, 32, 128], strides = [1, 1, 1, 1]} : vector<1x4x32x128xf32> to vector<1x1x32x128xf32>
    %8 = vector.shape_cast %7 : vector<1x1x32x128xf32> to vector<1x32x128xf32>
    %9 = arith.maximumf %6, %8 : vector<1x32x128xf32>
    %10 = vector.extract_strided_slice %4 {offsets = [0, 2, 0, 0], sizes = [1, 1, 32, 128], strides = [1, 1, 1, 1]} : vector<1x4x32x128xf32> to vector<1x1x32x128xf32>
    %11 = vector.shape_cast %10 : vector<1x1x32x128xf32> to vector<1x32x128xf32>
    %12 = vector.extract_strided_slice %4 {offsets = [0, 3, 0, 0], sizes = [1, 1, 32, 128], strides = [1, 1, 1, 1]} : vector<1x4x32x128xf32> to vector<1x1x32x128xf32>
    %13 = vector.shape_cast %12 : vector<1x1x32x128xf32> to vector<1x32x128xf32>
    %14 = arith.maximumf %11, %13 : vector<1x32x128xf32>
    %15 = arith.maximumf %9, %14 : vector<1x32x128xf32>
    %c0_4 = arith.constant 0 : index
    %c0_5 = arith.constant 0 : index
    %16 = vector.load %arg3[%c0_4, %c0_5] : memref<1x128xf32, #tpu.memory_space<vmem>>, vector<1x128xf32>
    %17 = vector.shape_cast %16 : vector<1x128xf32> to vector<1x1x128xf32>
    %18 = vector.broadcast %17 : vector<1x1x128xf32> to vector<1x32x128xf32>
    %19 = arith.addf %15, %18 : vector<1x32x128xf32>
    %cst_6 = arith.constant 0.000000e+00 : f32
    %20 = vector.broadcast %cst_6 : f32 to vector<1x32x128xf32>
    %21 = arith.maximumf %19, %20 : vector<1x32x128xf32>
    %c0_7 = arith.constant 0 : index
    %c0_8 = arith.constant 0 : index
    %c0_9 = arith.constant 0 : index
    %22 = vector.load %arg4[%c0_7, %c0_8, %c0_9] : memref<1x32x128xf32, #tpu.memory_space<vmem>>, vector<1x32x128xf32>
    tpu.vector_store %arg4[%c0_7, %c0_8, %c0_9], %21 {strides = array<i32>} : memref<1x32x128xf32, #tpu.memory_space<vmem>>, vector<1x32x128xf32>,
    return
  }
  func.func @transform_0(%arg0: i32) -> (i32, i32, i32) {
    %c0_i32 = arith.constant 0 : i32
    %c0_i32_0 = arith.constant 0 : i32
    %c0_i32_1 = arith.constant 0 : i32
    return %arg0, %c0_i32, %c0_i32_0 : i32, i32, i32
  }
  func.func @transform_1(%arg0: i32) -> (i32, i32) {
    %c0_i32 = arith.constant 0 : i32
    %c0_i32_0 = arith.constant 0 : i32
    %c0_i32_1 = arith.constant 0 : i32
    return %c0_i32, %c0_i32_0 : i32, i32
  }
  func.func @transform_2(%arg0: i32) -> (i32, i32) {
    %c0_i32 = arith.constant 0 : i32
    %c0_i32_0 = arith.constant 0 : i32
    %c0_i32_1 = arith.constant 0 : i32
    return %c0_i32, %c0_i32_0 : i32, i32
  }
  func.func @transform_3(%arg0: i32) -> (i32, i32, i32) {
    %c0_i32 = arith.constant 0 : i32
    %c0_i32_0 = arith.constant 0 : i32
    %c0_i32_1 = arith.constant 0 : i32
    return %arg0, %c0_i32, %c0_i32_0 : i32, i32, i32
  }
}

</mosaic_0001>

<llo_original>
// kernel: tpu_custom_call.1
$region0: #{tpu_custom_call.1}
  #allocation0 [shape = 'u32[]', space=smem, size = 0x4, offset = 0x4, fixed_abs, tag = 'smem constant byte address 0x4 - core index']
  #allocation1 [shape = 'u32[144,128]{1,0:T(1,128)}', space=vmem, size = 0x12000, scoped, tag = 'internal scratch']
  %s0 = inlined_call_operand.vmem [shape: bf16[2,128,150], index: 0, kind: input, shape index: {}]
  %s1 = inlined_call_operand.vmem [shape: bf16[150,128], index: 1, kind: input, shape index: {}]
  %s2 = inlined_call_operand.vmem [shape: f32[1,128], index: 2, kind: input, shape index: {}]
  %s3 = inlined_call_operand.hbm [shape: f32[2,32,128], index: 3, kind: output, shape index: {}]
  %s4 = sld [smem:[#allocation0]]
  $region45: #{tpu_custom_call.1} parent=0
    _
  %s6 = ssub.s32 1, %s4
  %s7 = scalar_select 0, %s6, %s4
  $region1: #{tpu_custom_call.1} parent=0
    #allocation2 [shape = 'u8[32768]{0}', space=vmem, size = 0x8000, scoped, tag = 'output window, operand 0']
    #allocation3 [shape = 's32[2]{0}', space=sflag, size = 0x8, scoped, tag = 'scoped memory for tpu_custom_call.1']
    %8 = vsyncpa [#allocation3], 0
    %s9 = scalar_lea.sflag [#allocation3], 1
    %10 = vsyncpa %s9, 0
    loop: start=0, step=1, limit=4
    $region2: #{tpu_custom_call.1} parent=1 // loop_pre_header
      _
    $region3: #{tpu_custom_call.1} parent=1 // loop_header
      %s12 = sphi 0, %s16
      %p13 = scmp.ge.s32.totalorder %s12, 4
      %s22 = sphi 0, %s24
      %s25 = sphi 0, %s22
      %s26 = sphi 0, %s25
      %s42 = sphi 0, %s26
      %s46 = sphi 0, %s46
      %s48 = sphi 0, %s46
      %s49 = sphi 0, %s48
      %s63 = sphi 0, %s49
      %s67 = sphi 0, %s67
      %s69 = sphi 0, %s67
      %s70 = sphi 0, %s69
      %s84 = sphi 0, %s70
      %s90 = sphi 0, %s92
      %s93 = sphi 0, %s90
      %s94 = sphi 0, %s93
      %s110 = sphi 0, %s94
    $region4: #{tpu_custom_call.1} parent=1 // loop_header_branch
      %15 = sbr.rel (%p13) target = $region8
    $region5: #{tpu_custom_call.1} parent=1 // loop_body
      %s17 = ssub.s32 %s12, 1
      %s18 = ssub.s32 %s12, 2
      %s19 = sadd.s32 %s12, 1
      %s20 = ssub.s32 %s12, %s19
      %p21 = scmp.eq.s32.totalorder %s20, 0
      %s23 = sadd.s32 %s22, 1
      %s24 = scalar_select %p21, %s22, %s23
      %p27 = pneg %p21
      %p28 = scmp.eq.s32.totalorder %s12, 1
      %p29 = por %p27, %p28
      %p30 = scmp.ne.s32.totalorder %s22, %s25
      %p31 = scmp.eq.s32.totalorder %s12, 0
      %p32 = por %p30, %p31
      %p33 = scmp.ne.s32.totalorder %s22, %s25
      %p34 = scmp.eq.s32.totalorder %s17, 1
      %p35 = por %p33, %p34
      %p36 = scmp.ne.s32.totalorder %s25, %s26
      %p37 = scmp.eq.s32.totalorder %s17, 0
      %p38 = por %p36, %p37
      %p39 = scmp.ne.s32.totalorder %s25, %s26
      %p40 = scmp.eq.s32.totalorder %s18, 1
      %p41 = por %p39, %p40
      %p43 = scmp.ne.s32.totalorder %s26, %s42
      %p44 = scmp.eq.s32.totalorder %s18, 0
      %p45 = por %p43, %p44
      %s47 = sadd.s32 %s46, 1
      %p50 = scmp.eq.s32.totalorder %s12, 1
      %p51 = scmp.ne.s32.totalorder %s46, %s48
      %p52 = scmp.eq.s32.totalorder %s12, 0
      %p53 = por %p51, %p52
      %p54 = scmp.ne.s32.totalorder %s46, %s48
      %p55 = scmp.eq.s32.totalorder %s17, 1
      %p56 = por %p54, %p55
      %p57 = scmp.ne.s32.totalorder %s48, %s49
      %p58 = scmp.eq.s32.totalorder %s17, 0
      %p59 = por %p57, %p58
      %p60 = scmp.ne.s32.totalorder %s48, %s49
      %p61 = scmp.eq.s32.totalorder %s18, 1
      %p62 = por %p60, %p61
      %p64 = scmp.ne.s32.totalorder %s49, %s63
      %p65 = scmp.eq.s32.totalorder %s18, 0
      %p66 = por %p64, %p65
      %s68 = sadd.s32 %s67, 1
      %p71 = scmp.eq.s32.totalorder %s12, 1
      %p72 = scmp.ne.s32.totalorder %s67, %s69
      %p73 = scmp.eq.s32.totalorder %s12, 0
      %p74 = por %p72, %p73
      %p75 = scmp.ne.s32.totalorder %s67, %s69
      %p76 = scmp.eq.s32.totalorder %s17, 1
      %p77 = por %p75, %p76
      %p78 = scmp.ne.s32.totalorder %s69, %s70
      %p79 = scmp.eq.s32.totalorder %s17, 0
      %p80 = por %p78, %p79
      %p81 = scmp.ne.s32.totalorder %s69, %s70
      %p82 = scmp.eq.s32.totalorder %s18, 1
      %p83 = por %p81, %p82
      %p85 = scmp.ne.s32.totalorder %s70, %s84
      %p86 = scmp.eq.s32.totalorder %s18, 0
      %p87 = por %p85, %p86
      %s88 = ssub.s32 %s12, %s19
      %p89 = scmp.eq.s32.totalorder %s88, 0
      %s91 = sadd.s32 %s90, 1
      %s92 = scalar_select %p89, %s90, %s91
      %p95 = pneg %p89
      %p96 = scmp.eq.s32.totalorder %s12, 1
      %p97 = por %p95, %p96
      %p98 = scmp.ne.s32.totalorder %s90, %s93
      %p99 = scmp.eq.s32.totalorder %s12, 0
      %p100 = por %p98, %p99
      %p101 = scmp.ne.s32.totalorder %s90, %s93
      %p102 = scmp.eq.s32.totalorder %s17, 1
      %p103 = por %p101, %p102
      %p104 = scmp.ne.s32.totalorder %s93, %s94
      %p105 = scmp.eq.s32.totalorder %s17, 0
      %p106 = por %p104, %p105
      %p107 = scmp.ne.s32.totalorder %s93, %s94
      %p108 = scmp.eq.s32.totalorder %s18, 1
      %p109 = por %p107, %p108
      %p111 = scmp.ne.s32.totalorder %s94, %s110
      %p112 = scmp.eq.s32.totalorder %s18, 0
      %p113 = por %p111, %p112
      %p114 = scmp.le.s32.totalorder 1, %s12
      %p115 = scmp.lt.s32.totalorder %s12, 3
      %p116 = pnand %p114, %p115
      %p117 = pneg %p116
      // Predicated region
      $region9: #{tpu_custom_call.1} parent=5 // pred_check
        _
      $region10: #{tpu_custom_call.1} parent=5 // pred_check_branch
        %119 = sbr.rel (%p116) target = $region12
      $region11: #{tpu_custom_call.1} parent=5 // pred_region
        %s120 = ssub.s32 %s12, 1
        // Predicated region
        $region13: #{tpu_custom_call.1} parent=11 // pred_check
          %p121 = pneg %p59
        $region14: #{tpu_custom_call.1} parent=11 // pred_check_branch
          %123 = sbr.rel (%p121) target = $region16
        $region15: #{tpu_custom_call.1} parent=11 // pred_region
          _
        $region16: #{tpu_custom_call.1} parent=11 // pred_fallthru
          _
        // Predicated region
        $region17: #{tpu_custom_call.1} parent=11 // pred_check
          %p124 = pneg %p80
        $region18: #{tpu_custom_call.1} parent=11 // pred_check_branch
          %126 = sbr.rel (%p124) target = $region20
        $region19: #{tpu_custom_call.1} parent=11 // pred_region
          _
        $region20: #{tpu_custom_call.1} parent=11 // pred_fallthru
          _
      $region12: #{tpu_custom_call.1} parent=5 // pred_fallthru
        _
      %p127 = scmp.lt.s32.totalorder %s12, 2
      // Predicated region
      $region21: #{tpu_custom_call.1} parent=5 // pred_check
        %p128 = pneg %p127
      $region22: #{tpu_custom_call.1} parent=5 // pred_check_branch
        %130 = sbr.rel (%p128) target = $region24
      $region23: #{tpu_custom_call.1} parent=5 // pred_region
        // Predicated region
        $region25: #{tpu_custom_call.1} parent=23 // pred_check
          %p131 = pneg %p32
        $region26: #{tpu_custom_call.1} parent=23 // pred_check_branch
          %133 = sbr.rel (%p131) target = $region28
        $region27: #{tpu_custom_call.1} parent=23 // pred_region
          %p134 = scmp.lt.s32.totalorder %s12, 1
          %s135 = scalar_select %p134, %s12, 1
          %s136 = smul.addr %s135, 32
          %s137 = smul.addr %s136, 4
          %s138 = scalar_lea.vmem %s0, %s137
        $region28: #{tpu_custom_call.1} parent=23 // pred_fallthru
          _
      $region24: #{tpu_custom_call.1} parent=5 // pred_fallthru
        _
      %p139 = scmp.le.s32.totalorder 1, %s12
      %p140 = scmp.lt.s32.totalorder %s12, 3
      %p141 = pnand %p139, %p140
      %p142 = pneg %p141
      // Predicated region
      $region29: #{tpu_custom_call.1} parent=5 // pred_check
        _
      $region30: #{tpu_custom_call.1} parent=5 // pred_check_branch
        %144 = sbr.rel (%p141) target = $region32
      $region31: #{tpu_custom_call.1} parent=5 // pred_region
        %s145 = ssub.s32 %s12, 1
        %p146 = scmp.lt.s32.totalorder %s17, 1
        %s147 = scalar_select %p146, %s17, 1
        %s148 = smul.addr %s147, 32
        %s149 = smul.addr %s148, 4
        %s150 = scalar_lea.vmem %s0, %s149
        %p151 = pneg %p38
        %p152 = pneg %p35
        %p153 = pneg %p59
        %p154 = pneg %p56
        %p155 = pneg %p80
        %p156 = pneg %p77
        %p157 = pneg %p106
        %p158 = pneg %p103
        %s159 = sand.u32 %s93, 1
        %s160 = scalar_lea.sflag [#allocation3], %s159
        %s161 = sand.u32 %s93, 1
        %s162 = smul.addr %s161, 32
        %s163 = scalar_lea.vmem [#allocation2], %s162
        %p164 = scmp.lt.s32.totalorder %s17, 1
        %s165 = scalar_select %p164, %s17, 1
        %s166 = smul.addr %s165, 32
        %s167 = smul.addr %s166, 4
        %s168 = scalar_lea.vmem %s0, %s167
        %v170 = vld [vmem:[%s168] sm:$0xff]
        %v171 = vld [vmem:[%s168 + $0x8] sm:$0xff]
        %v172 = vld [vmem:[%s168 + $0x10] sm:$0xff]
        %v173 = vld [vmem:[%s168 + $0x18] sm:$0xff]
        %v174 = vld [vmem:[%s168 + $0x20] sm:$0xff]
        %v175 = vld [vmem:[%s168 + $0x28] sm:$0xff]
        %v176 = vld [vmem:[%s168 + $0x30] sm:$0xff]
        %v177 = vld [vmem:[%s168 + $0x38] sm:$0xff]
        %v178 = vld [vmem:[%s168 + $0x40] sm:$0xff]
        %v179 = vld [vmem:[%s168 + $0x48] sm:$0xff]
        %v180 = vld [vmem:[%s168 + $0x50] sm:$0xff]
        %v181 = vld [vmem:[%s168 + $0x58] sm:$0xff]
        %v182 = vld [vmem:[%s168 + $0x60] sm:$0xff]
        %v183 = vld [vmem:[%s168 + $0x68] sm:$0xff]
        %v184 = vld [vmem:[%s168 + $0x70] sm:$0xff]
        %v185 = vld [vmem:[%s168 + $0x78] sm:$0xff]
        %v186 = vld [vmem:[%s1] sm:$0xf]
        %v187 = vld [vmem:[%s1 + $0x4] sm:$0xf]
        %v188 = vld [vmem:[%s1 + $0x8] sm:$0xf]
        %v189 = vld [vmem:[%s1 + $0xc] sm:$0xf]
        %v190 = vld [vmem:[%s1 + $0x10] sm:$0xf]
        %v191 = vld [vmem:[%s1 + $0x14] sm:$0xf]
        %v192 = vld [vmem:[%s1 + $0x18] sm:$0xf]
        %v193 = vld [vmem:[%s1 + $0x1c] sm:$0xf]
        %v194 = vld [vmem:[%s1 + $0x20] sm:$0xf]
        %v195 = vld [vmem:[%s1 + $0x24] sm:$0xf]
        %v196 = vld [vmem:[%s1 + $0x28] sm:$0xf]
        %v197 = vld [vmem:[%s1 + $0x2c] sm:$0xf]
        %v198 = vld [vmem:[%s1 + $0x30] sm:$0xf]
        %v199 = vld [vmem:[%s1 + $0x34] sm:$0xf]
        %v200 = vld [vmem:[%s1 + $0x38] sm:$0xf]
        %v201 = vld [vmem:[%s1 + $0x3c] sm:$0xf]
        %v202 = vld [vmem:[%s1 + $0x40] sm:$0xf]
        %v203 = vld [vmem:[%s1 + $0x44] sm:$0xf]
        %v204 = vld [vmem:[%s1 + $0x48] sm:$0x7]
        %v221 = vunpack.c.l.b16 %v170
        %v222 = vunpack.c.h.b16 %v170
        %v223 = vunpack.c.l.b16 %v171
        %v224 = vunpack.c.h.b16 %v171
        %v225 = vunpack.c.l.b16 %v172
        %v226 = vunpack.c.h.b16 %v172
        %v227 = vunpack.c.l.b16 %v173
        %v228 = vunpack.c.h.b16 %v173
        %v229 = vunpack.c.l.b16 %v174
        %v230 = vunpack.c.h.b16 %v174
        %v231 = vunpack.c.l.b16 %v175
        %v232 = vunpack.c.h.b16 %v175
        %v233 = vunpack.c.l.b16 %v176
        %v234 = vunpack.c.h.b16 %v176
        %v235 = vunpack.c.l.b16 %v177
        %v236 = vunpack.c.h.b16 %v177
        %v237 = vunpack.c.l.b16 %v178
        %v238 = vunpack.c.h.b16 %v178
        %v239 = vunpack.c.l.b16 %v179
        %v240 = vunpack.c.h.b16 %v179
        %v241 = vunpack.c.l.b16 %v180
        %v242 = vunpack.c.h.b16 %v180
        %v243 = vunpack.c.l.b16 %v181
        %v244 = vunpack.c.h.b16 %v181
        %v245 = vunpack.c.l.b16 %v182
        %v246 = vunpack.c.h.b16 %v182
        %v247 = vunpack.c.l.b16 %v183
        %v248 = vunpack.c.h.b16 %v183
        %v249 = vunpack.c.l.b16 %v184
        %v250 = vunpack.c.h.b16 %v184
        %v251 = vunpack.c.l.b16 %v185
        %v252 = vunpack.c.h.b16 %v185
        %v253 = vpack.c.b16 %v223, %v221
        %v254 = vpack.c.b16 %v224, %v222
        %v255 = vpack.c.b16 %v227, %v225
        %v256 = vpack.c.b16 %v228, %v226
        %v257 = vpack.c.b16 %v231, %v229
        %v258 = vpack.c.b16 %v232, %v230
        %v259 = vpack.c.b16 %v235, %v233
        %v260 = vpack.c.b16 %v236, %v234
        %v261 = vpack.c.b16 %v239, %v237
        %v262 = vpack.c.b16 %v240, %v238
        %v263 = vpack.c.b16 %v243, %v241
        %v264 = vpack.c.b16 %v244, %v242
        %v265 = vpack.c.b16 %v247, %v245
        %v266 = vpack.c.b16 %v248, %v246
        %v267 = vpack.c.b16 %v251, %v249
        %v268 = vpack.c.b16 %v252, %v250
        %v296 = vunpack.c.l.b16 %v186
        %v297 = vunpack.c.l.b16 %v187
        %v298 = vunpack.c.l.b16 %v188
        %v299 = vunpack.c.l.b16 %v189
        %v300 = vunpack.c.l.b16 %v190
        %v301 = vunpack.c.l.b16 %v191
        %v302 = vunpack.c.l.b16 %v192
        %v303 = vunpack.c.l.b16 %v193
        %v304 = vunpack.c.l.b16 %v194
        %v305 = vunpack.c.l.b16 %v195
        %v306 = vunpack.c.l.b16 %v196
        %v307 = vunpack.c.l.b16 %v197
        %v308 = vunpack.c.l.b16 %v198
        %v309 = vunpack.c.l.b16 %v199
        %v310 = vunpack.c.l.b16 %v200
        %v311 = vunpack.c.l.b16 %v201
        %v312 = vunpack.c.l.b16 %v202
        %v313 = vunpack.c.l.b16 %v203
        %v314 = vunpack.c.l.b16 %v204
        %v315 = vpack.c.b16 %v297, %v296
        %v316 = vpack.c.b16 %v299, %v298
        %v317 = vpack.c.b16 %v301, %v300
        %v318 = vpack.c.b16 %v303, %v302
        %v319 = vpack.c.b16 %v305, %v304
        %v320 = vpack.c.b16 %v307, %v306
        %v321 = vpack.c.b16 %v309, %v308
        %v322 = vpack.c.b16 %v311, %v310
        %v323 = vpack.c.b16 %v313, %v312
        %v324 = vpack.c.b16 %v314, %v314
        %vm334 = vcmask 179200
        %v336 = vsel %vm334, %v254, 0
        %v339 = vsel %vm334, %v256, 0
        %v342 = vsel %vm334, %v258, 0
        %v345 = vsel %vm334, %v260, 0
        %v348 = vsel %vm334, %v262, 0
        %v351 = vsel %vm334, %v264, 0
        %v354 = vsel %vm334, %v266, 0
        %v357 = vsel %vm334, %v268, 0
        %vm359 = vcmask 1042432
        %v361 = vsel %vm359, %v324, 0
        %363 = vmatprep.subr.bf16.mxu0 0
        %364 = vmatpush1.bf16.msra.mxu0 %v315
        %365 = vmatprep.subr.bf16.mxu0 0
        %366 = vmatpush1.bf16.msra.mxu0 %v316
        %367 = vmatprep.subr.bf16.mxu0 0
        %368 = vmatpush1.bf16.msra.mxu0 %v317
        %369 = vmatprep.subr.bf16.mxu0 0
        %370 = vmatpush1.bf16.msra.mxu0 %v318
        %371 = vmatprep.subr.bf16.mxu0 0
        %372 = vmatpush1.bf16.msra.mxu0 %v319
        %373 = vmatprep.subr.bf16.mxu0 0
        %374 = vmatpush1.bf16.msra.mxu0 %v320
        %375 = vmatprep.subr.bf16.mxu0 0
        %376 = vmatpush1.bf16.msra.mxu0 %v321
        %377 = vmatprep.subr.bf16.mxu0 0
        %378 = vmatpush1.bf16.msra.mxu0 %v322
        %379 = vmatprep.subr.bf16.mxu0 0
        %380 = vmatpush1.bf16.msra.mxu0 %v323
        %381 = vmatprep.subr.bf16.mxu0 0
        %382 = vmatpush1.bf16.msra.mxu0 %v361
        %383 = vmatprep.subr.bf16.mxu0 0
        %384 = vmatpush1.bf16.msra.mxu0 0
        %385 = vmatprep.subr.bf16.mxu0 0
        %386 = vmatpush1.bf16.msra.mxu0 0
        %387 = vmatprep.subr.bf16.mxu0 0
        %388 = vmatpush1.bf16.msra.mxu0 0
        %389 = vmatprep.subr.bf16.mxu0 0
        %390 = vmatpush1.bf16.msra.mxu0 0
        %391 = vmatprep.subr.bf16.mxu0 0
        %392 = vmatpush1.bf16.msra.mxu0 0
        %393 = vmatprep.subr.bf16.mxu0 0
        %394 = vmatpush1.bf16.msra.mxu0 0
        %395 = vmatprep.mubr.bf16.mxu0 %v336
        %396 = vmatmul.mubr.bf16.gmra.mrb[0].mxu0 %v253
        %v397 = vpop.f32.mrb[0].mxu0
        %v398 = vadd.f32 0.0, %v397
        %v399 = vpop.f32.mrb[0].mxu0
        %v400 = vpop.f32.mrb[0].mxu0
        %v401 = vadd.f32 0.0, %v400
        %v402 = vpop.f32.mrb[0].mxu0
        %403 = vmatprep.mubr.bf16.mxu0 %v339
        %404 = vmatmul.mubr.bf16.gmra.mrb[0].mxu0 %v255
        %v405 = vpop.f32.mrb[0].mxu0
        %v406 = vadd.f32 0.0, %v405
        %v407 = vpop.f32.mrb[0].mxu0
        %v408 = vpop.f32.mrb[0].mxu0
        %v409 = vadd.f32 0.0, %v408
        %v410 = vpop.f32.mrb[0].mxu0
        %411 = vmatprep.mubr.bf16.mxu0 %v342
        %412 = vmatmul.mubr.bf16.gmra.mrb[0].mxu0 %v257
        %v413 = vpop.f32.mrb[0].mxu0
        %v414 = vadd.f32 0.0, %v413
        %v415 = vpop.f32.mrb[0].mxu0
        %v416 = vpop.f32.mrb[0].mxu0
        %v417 = vadd.f32 0.0, %v416
        %v418 = vpop.f32.mrb[0].mxu0
        %419 = vmatprep.mubr.bf16.mxu0 %v345
        %420 = vmatmul.mubr.bf16.gmra.mrb[0].mxu0 %v259
        %v421 = vpop.f32.mrb[0].mxu0
        %v422 = vadd.f32 0.0, %v421
        %v423 = vpop.f32.mrb[0].mxu0
        %v424 = vpop.f32.mrb[0].mxu0
        %v425 = vadd.f32 0.0, %v424
        %v426 = vpop.f32.mrb[0].mxu0
        %427 = vmatprep.mubr.bf16.mxu0 %v348
        %428 = vmatmul.mubr.bf16.gmra.mrb[0].mxu0 %v261
        %v429 = vpop.f32.mrb[0].mxu0
        %v430 = vadd.f32 0.0, %v429
        %v431 = vpop.f32.mrb[0].mxu0
        %v432 = vpop.f32.mrb[0].mxu0
        %v433 = vadd.f32 0.0, %v432
        %v434 = vpop.f32.mrb[0].mxu0
        %435 = vmatprep.mubr.bf16.mxu0 %v351
        %436 = vmatmul.mubr.bf16.gmra.mrb[0].mxu0 %v263
        %v437 = vpop.f32.mrb[0].mxu0
        %v438 = vadd.f32 0.0, %v437
        %v439 = vpop.f32.mrb[0].mxu0
        %v440 = vpop.f32.mrb[0].mxu0
        %v441 = vadd.f32 0.0, %v440
        %v442 = vpop.f32.mrb[0].mxu0
        %443 = vmatprep.mubr.bf16.mxu0 %v354
        %444 = vmatmul.mubr.bf16.gmra.mrb[0].mxu0 %v265
        %v445 = vpop.f32.mrb[0].mxu0
        %v446 = vadd.f32 0.0, %v445
        %v447 = vpop.f32.mrb[0].mxu0
        %v448 = vpop.f32.mrb[0].mxu0
        %v449 = vadd.f32 0.0, %v448
        %v450 = vpop.f32.mrb[0].mxu0
        %451 = vmatprep.mubr.bf16.mxu0 %v357
        %452 = vmatmul.mubr.bf16.gmra.mrb[0].mxu0 %v267
        %v453 = vpop.f32.mrb[0].mxu0
        %v454 = vadd.f32 0.0, %v453
        %v455 = vpop.f32.mrb[0].mxu0
        %v456 = vpop.f32.mrb[0].mxu0
        %v457 = vadd.f32 0.0, %v456
        %v458 = vpop.f32.mrb[0].mxu0
        %459 = vdwg.mxu0
        %v460 = vmax.f32 %v398, %v414
        %v461 = vmax.f32 %v401, %v417
        %v462 = vmax.f32 %v406, %v422
        %v463 = vmax.f32 %v409, %v425
        %v464 = vmax.f32 %v430, %v446
        %v465 = vmax.f32 %v433, %v449
        %v466 = vmax.f32 %v438, %v454
        %v467 = vmax.f32 %v441, %v457
        %v468 = vmax.f32 %v460, %v464
        %v469 = vmax.f32 %v461, %v465
        %v470 = vmax.f32 %v462, %v466
        %v471 = vmax.f32 %v463, %v467
        %v472 = vld [vmem:[%s2] sm:$0x1]
        %v474 = vlaneseq
        %v475 = vshrl.u32 %v474, 7
        %v476 = vsub.s32 0, %v475
        %v477 = vrot.slane %v472, %v476
        %v479 = vadd.f32 %v468, %v477
        %v480 = vadd.f32 %v469, %v477
        %v481 = vadd.f32 %v470, %v477
        %v482 = vadd.f32 %v471, %v477
        %v483 = vmax.f32 %v479, 0.0
        %v484 = vmax.f32 %v480, 0.0
        %v485 = vmax.f32 %v481, 0.0
        %v486 = vmax.f32 %v482, 0.0
        %487 = vst [vmem:[%s163] sm:$0xff] %v483
        %488 = vst [vmem:[%s163 + $0x8] sm:$0xff] %v484
        %489 = vst [vmem:[%s163 + $0x10] sm:$0xff] %v485
        %490 = vst [vmem:[%s163 + $0x18] sm:$0xff] %v486
        %s491 = sand.u32 %s93, 1
        %s492 = scalar_lea.sflag [#allocation3], %s491
        %s493 = sand.u32 %s93, 1
        %s494 = smul.addr %s493, 32
        %s495 = scalar_lea.vmem [#allocation2], %s494
        // Predicated region
        $region33: #{tpu_custom_call.1} parent=31 // pred_check
          %p496 = pneg %p103
        $region34: #{tpu_custom_call.1} parent=31 // pred_check_branch
          %498 = sbr.rel (%p496) target = $region36
        $region35: #{tpu_custom_call.1} parent=31 // pred_region
          %s500 = ssub.s32 512, 512
          %501 = vsyncadd %s492, %s500
          %s502 = smul.addr %s17, 4
          %s503 = smul.addr %s502, 128
          %s504 = scalar_lea.hbm %s3, %s503
          %s505 = sshll.u32 %s495, 4
          %s506 = int_to_ptr.vmem [resolvable:$true] %s505
          %511 = dma.vmem_to_hbm [thread:$0]  %s506, 512, %s504, %s492, 128, 128, 8
        $region36: #{tpu_custom_call.1} parent=31 // pred_fallthru
          _
      $region32: #{tpu_custom_call.1} parent=5 // pred_fallthru
        _
      %p512 = scmp.le.s32.totalorder 2, %s12
      // Predicated region
      $region37: #{tpu_custom_call.1} parent=5 // pred_check
        %p513 = pneg %p512
      $region38: #{tpu_custom_call.1} parent=5 // pred_check_branch
        %515 = sbr.rel (%p513) target = $region40
      $region39: #{tpu_custom_call.1} parent=5 // pred_region
        %s516 = ssub.s32 %s12, 2
        // Predicated region
        $region41: #{tpu_custom_call.1} parent=39 // pred_check
          %p517 = pneg %p109
        $region42: #{tpu_custom_call.1} parent=39 // pred_check_branch
          %519 = sbr.rel (%p517) target = $region44
        $region43: #{tpu_custom_call.1} parent=39 // pred_region
          %s520 = sand.u32 %s94, 1
          %s521 = scalar_lea.sflag [#allocation3], %s520
          %s522 = sand.u32 %s94, 1
          %s523 = smul.addr %s522, 32
          %s524 = scalar_lea.vmem [#allocation2], %s523
          %525 = dma.done %s521, 512
        $region44: #{tpu_custom_call.1} parent=39 // pred_fallthru
          _
      $region40: #{tpu_custom_call.1} parent=5 // pred_fallthru
        _
    $region6: #{tpu_custom_call.1} parent=1 // loop_footer
      %s16 = sadd.s32 1, %s12
    $region7: #{tpu_custom_call.1} parent=1 // loop_footer_branch
      %11 = sbr.rel target = $region3
    $region8: #{tpu_custom_call.1} parent=1 // loop_exit
      _
    %526 = vsyncpa [#allocation3], 1
    %s527 = scalar_lea.sflag [#allocation3], 1
    %528 = vsyncpa %s527, 1

</llo_original>
